<compile_context>
chip_gen: v7x
topology: tpu7x:2x2x1
jax: 0.10.0
libtpu: 0.0.40
codegen_flags: <defaults>
</compile_context>

<pallas_src>
import jax
import jax.numpy as jnp
from jax.experimental import pallas as pl
from jax.experimental.pallas import tpu as pltpu


def _round_up(x, m):
    return ((x + m - 1) // m) * m


def mlp2l_kernel(x_ref, w1_ref, b1_ref, w2_ref, b2_ref, w3_ref, b3_ref, o_ref):
    # x: (tm, Dp) bf16 | w1: (Dp, H1p) bf16 | b1: (1, H1p) f32
    # w2: (H1p, H2p) bf16 | b2: (1, H2p) f32 | w3: (1, H2p) f32 | b3: (1,1) f32 SMEM
    x = x_ref[...]

    # Layer 1: bf16 MXU matmul, fp32 accumulate, bias + ReLU on VPU.
    h1 = jnp.dot(x, w1_ref[...], preferred_element_type=jnp.float32) + b1_ref[...]
    h1 = jnp.maximum(h1, 0.0)

    # Layer 2: bf16 MXU matmul, fp32 accumulate, bias + ReLU.
    h2 = jnp.dot(h1.astype(jnp.bfloat16), w2_ref[...],
                 preferred_element_type=jnp.float32) + b2_ref[...]
    h2 = jnp.maximum(h2, 0.0)

    # Layer 3 (out_features == 1): VPU multiply + XLU lane reduction instead of
    # an N=1 MXU matmul; bias read as an SMEM scalar.
    out = jnp.sum(h2 * w3_ref[...], axis=-1, keepdims=True) + b3_ref[0, 0]
    o_ref[...] = out.astype(o_ref.dtype)


def mlp2l_forward(x_nchw, params):
    """x_nchw: (B, C, H, W) float32. Returns (B, 1) float32."""
    w1, b1, w2, b2, w3, b3 = params
    B = x_nchw.shape[0]
    x2d = x_nchw.reshape(B, -1)                      # nn.Flatten() (row-major)
    D = x2d.shape[1]
    H1 = w1.shape[1]
    H2 = w2.shape[1]

    # Lane-dense padded feature sizes.
    Dp = _round_up(D, 128)
    H1p = _round_up(H1, 128)
    H2p = _round_up(H2, 128)

    # Batch tiling: 128-row tiles when the batch is large enough, otherwise a
    # single sublane-padded tile.
    if B >= 128:
        tm = 128
        Bp = _round_up(B, tm)
    else:
        Bp = _round_up(B, 8)
        tm = Bp
    grid = (Bp // tm,)

    # Zero-pad + cast. Zero rows/cols contribute nothing (0-weight matmul,
    # +0 bias, ReLU(0)=0, 0-weight in the final sum), so results are exact.
    xp = jnp.zeros((Bp, Dp), jnp.bfloat16).at[:B, :D].set(x2d.astype(jnp.bfloat16))
    w1p = jnp.zeros((Dp, H1p), jnp.bfloat16).at[:D, :H1].set(w1.astype(jnp.bfloat16))
    b1p = jnp.zeros((1, H1p), jnp.float32).at[:, :H1].set(b1)
    w2p = jnp.zeros((H1p, H2p), jnp.bfloat16).at[:H1, :H2].set(w2.astype(jnp.bfloat16))
    b2p = jnp.zeros((1, H2p), jnp.float32).at[:, :H2].set(b2)
    w3p = jnp.zeros((1, H2p), jnp.float32).at[:, :H2].set(w3.reshape(1, H2))
    b3p = b3.reshape(1, 1).astype(jnp.float32)

    const = lambda i: (0, 0)  # weights / biases stay VMEM-resident across batch tiles

    out_padded = pl.pallas_call(
        mlp2l_kernel,
        out_shape=jax.ShapeDtypeStruct((Bp, 1), jnp.float32),
        grid=grid,
        in_specs=[
            pl.BlockSpec((tm, Dp), lambda i: (i, 0)),            # x batch tile
            pl.BlockSpec((Dp, H1p), const),                      # w1 (resident)
            pl.BlockSpec((1, H1p), const),                       # b1
            pl.BlockSpec((H1p, H2p), const),                     # w2 (resident)
            pl.BlockSpec((1, H2p), const),                       # b2
            pl.BlockSpec((1, H2p), const),                       # w3 row (fp32)
            pl.BlockSpec(memory_space=pltpu.MemorySpace.SMEM),   # b3 scalar
        ],
        out_specs=pl.BlockSpec((tm, 1), lambda i: (i, 0)),
        compiler_params=pltpu.CompilerParams(
            dimension_semantics=("parallel",),                   # 2x on v7x dual-TC
        ),
    )(xp, w1p, b1p, w2p, b2p, w3p, b3p)

    return out_padded[:B]


def init_params(key, in_size):
    """Deterministic init mimicking nn.Linear default (uniform +-1/sqrt(fan_in)).

    Weights stored as (in_features, out_features); biases as (1, out_features).
    """
    h1 = int(2 * in_size)
    h2 = int(0.5 * in_size)   # matches PyTorch's int() truncation
    dims = [(in_size, h1), (h1, h2), (h2, 1)]
    params = []
    for (fan_in, fan_out) in dims:
        key, kw, kb = jax.random.split(key, 3)
        bound = 1.0 / jnp.sqrt(jnp.float32(fan_in))
        w = jax.random.uniform(kw, (fan_in, fan_out), jnp.float32, -bound, bound)
        b = jax.random.uniform(kb, (1, fan_out), jnp.float32, -bound, bound)
        params += [w, b]
    return tuple(params)


def reference_forward(x_nchw, params):
    w1, b1, w2, b2, w3, b3 = params
    x = x_nchw.reshape(x_nchw.shape[0], -1)
    x = jnp.maximum(x @ w1 + b1, 0.0)
    x = jnp.maximum(x @ w2 + b2, 0.0)
    return x @ w3 + b3


if __name__ == "__main__":
    key = jax.random.PRNGKey(0)
    k_x, k_p = jax.random.split(key)

    # Small NCHW input: (batch=2, channels=4, H=4, W=4) -> in_size = 64.
    B, C, H, W = 2, 4, 4, 4
    in_size = C * H * W
    x = jax.random.normal(k_x, (B, C, H, W), jnp.float32)

    params = init_params(k_p, in_size)

    out = mlp2l_forward(x, params)
    out = jax.block_until_ready(out)

    ref = reference_forward(x, params)
    assert out.shape == (B, 1), out.shape
    # bf16 MXU inputs (fp32 accumulate) vs fp32 reference -> looser tolerance.
    assert jnp.allclose(out, ref, atol=3e-2, rtol=3e-2), (out, ref)

    print("KERNEL_OK")
</pallas_src>

<mosaic_0001>
module attributes {stable_mosaic.version = 11 : i64} {
  func.func @mlp2l_kernel(%arg0: i32, %arg1: memref<8x128xbf16, #tpu.memory_space<vmem>>, %arg2: memref<128x128xbf16, #tpu.memory_space<vmem>>, %arg3: memref<1x128xf32, #tpu.memory_space<vmem>>, %arg4: memref<128x128xbf16, #tpu.memory_space<vmem>>, %arg5: memref<1x128xf32, #tpu.memory_space<vmem>>, %arg6: memref<1x128xf32, #tpu.memory_space<vmem>>, %arg7: memref<1x1xf32, #tpu.memory_space<smem>>, %arg8: memref<8x1xf32, #tpu.memory_space<vmem>>) attributes {dimension_semantics = [#tpu.dimension_semantics<parallel>], iteration_bounds = array<i64: 1>, scalar_prefetch = 0 : i64, scratch_operands = 0 : i64, tpu.core_type = #tpu.core_type<tc>, window_params = [{transform_indices = @transform_0, window_bounds = array<i64: 8, 128>}, {pipeline_mode = #tpu.pipeline_mode<synchronous>, transform_indices = @transform_1, window_bounds = array<i64: 128, 128>}, {pipeline_mode = #tpu.pipeline_mode<synchronous>, transform_indices = @transform_2, window_bounds = array<i64: 1, 128>}, {pipeline_mode = #tpu.pipeline_mode<synchronous>, transform_indices = @transform_3, window_bounds = array<i64: 128, 128>}, {pipeline_mode = #tpu.pipeline_mode<synchronous>, transform_indices = @transform_4, window_bounds = array<i64: 1, 128>}, {pipeline_mode = #tpu.pipeline_mode<synchronous>, transform_indices = @transform_5, window_bounds = array<i64: 1, 128>}, {transform_indices = @transform_6, window_bounds = array<i64: 1, 1>}, {transform_indices = @transform_7, window_bounds = array<i64: 8, 1>}]} {
    %c0 = arith.constant 0 : index
    %c0_0 = arith.constant 0 : index
    %0 = vector.load %arg1[%c0, %c0_0] : memref<8x128xbf16, #tpu.memory_space<vmem>>, vector<8x128xbf16>
    %c0_1 = arith.constant 0 : index
    %c0_2 = arith.constant 0 : index
    %1 = vector.load %arg2[%c0_1, %c0_2] : memref<128x128xbf16, #tpu.memory_space<vmem>>, vector<128x128xbf16>
    %cst = arith.constant dense<0.000000e+00> : vector<8x128xf32>
    %2 = tpu.matmul %0, %1, %cst {dimension_numbers = #tpu.dot_dimension_numbers<[1], [0], [0], [1], [0, 0, 1, 1], [], []>} : vector<8x128xbf16>, vector<128x128xbf16>, vector<8x128xf32> -> vector<8x128xf32>
    %c0_3 = arith.constant 0 : index
    %c0_4 = arith.constant 0 : index
    %3 = vector.load %arg3[%c0_3, %c0_4] : memref<1x128xf32, #tpu.memory_space<vmem>>, vector<1x128xf32>
    %4 = vector.broadcast %3 : vector<1x128xf32> to vector<8x128xf32>
    %5 = arith.addf %2, %4 : vector<8x128xf32>
    %cst_5 = arith.constant 0.000000e+00 : f32
    %6 = vector.broadcast %cst_5 : f32 to vector<8x128xf32>
    %7 = arith.maximumf %5, %6 : vector<8x128xf32>
    %8 = arith.truncf %7 : vector<8x128xf32> to vector<8x128xbf16>
    %c0_6 = arith.constant 0 : index
    %c0_7 = arith.constant 0 : index
    %9 = vector.load %arg4[%c0_6, %c0_7] : memref<128x128xbf16, #tpu.memory_space<vmem>>, vector<128x128xbf16>
    %cst_8 = arith.constant dense<0.000000e+00> : vector<8x128xf32>
    %10 = tpu.matmul %8, %9, %cst_8 {dimension_numbers = #tpu.dot_dimension_numbers<[1], [0], [0], [1], [0, 0, 1, 1], [], []>} : vector<8x128xbf16>, vector<128x128xbf16>, vector<8x128xf32> -> vector<8x128xf32>
    %c0_9 = arith.constant 0 : index
    %c0_10 = arith.constant 0 : index
    %11 = vector.load %arg5[%c0_9, %c0_10] : memref<1x128xf32, #tpu.memory_space<vmem>>, vector<1x128xf32>
    %12 = vector.broadcast %11 : vector<1x128xf32> to vector<8x128xf32>
    %13 = arith.addf %10, %12 : vector<8x128xf32>
    %cst_11 = arith.constant 0.000000e+00 : f32
    %14 = vector.broadcast %cst_11 : f32 to vector<8x128xf32>
    %15 = arith.maximumf %13, %14 : vector<8x128xf32>
    %c0_12 = arith.constant 0 : index
    %c0_13 = arith.constant 0 : index
    %16 = vector.load %arg6[%c0_12, %c0_13] : memref<1x128xf32, #tpu.memory_space<vmem>>, vector<1x128xf32>
    %17 = vector.broadcast %16 : vector<1x128xf32> to vector<8x128xf32>
    %18 = arith.mulf %15, %17 : vector<8x128xf32>
    %cst_14 = arith.constant dense<0.000000e+00> : vector<8xf32>
    %19 = vector.multi_reduction <add>, %18, %cst_14 [1] : vector<8x128xf32> to vector<8xf32>
    %20 = vector.shape_cast %19 : vector<8xf32> to vector<8x1xf32>
    %c0_15 = arith.constant 0 : index
    %c0_16 = arith.constant 0 : index
    %21 = memref.load %arg7[%c0_15, %c0_16] : memref<1x1xf32, #tpu.memory_space<smem>>
    %22 = vector.broadcast %21 : f32 to vector<8x1xf32>
    %23 = arith.addf %20, %22 : vector<8x1xf32>
    %c0_17 = arith.constant 0 : index
    %c0_18 = arith.constant 0 : index
    %24 = vector.load %arg8[%c0_17, %c0_18] : memref<8x1xf32, #tpu.memory_space<vmem>>, vector<8x1xf32>
    tpu.vector_store %arg8[%c0_17, %c0_18], %23 {strides = array<i32>} : memref<8x1xf32, #tpu.memory_space<vmem>>, vector<8x1xf32>,
    return
  }
  func.func @transform_0(%arg0: i32) -> (i32, i32) {
    %c0_i32 = arith.constant 0 : i32
    %c0_i32_0 = arith.constant 0 : i32
    return %arg0, %c0_i32 : i32, i32
  }
  func.func @transform_1(%arg0: i32) -> (i32, i32) {
    %c0_i32 = arith.constant 0 : i32
    %c0_i32_0 = arith.constant 0 : i32
    %c0_i32_1 = arith.constant 0 : i32
    return %c0_i32, %c0_i32_0 : i32, i32
  }
  func.func @transform_2(%arg0: i32) -> (i32, i32) {
    %c0_i32 = arith.constant 0 : i32
    %c0_i32_0 = arith.constant 0 : i32
    %c0_i32_1 = arith.constant 0 : i32
    return %c0_i32, %c0_i32_0 : i32, i32
  }
  func.func @transform_3(%arg0: i32) -> (i32, i32) {
    %c0_i32 = arith.constant 0 : i32
    %c0_i32_0 = arith.constant 0 : i32
    %c0_i32_1 = arith.constant 0 : i32
    return %c0_i32, %c0_i32_0 : i32, i32
  }
  func.func @transform_4(%arg0: i32) -> (i32, i32) {
    %c0_i32 = arith.constant 0 : i32
    %c0_i32_0 = arith.constant 0 : i32
    %c0_i32_1 = arith.constant 0 : i32
    return %c0_i32, %c0_i32_0 : i32, i32
  }
  func.func @transform_5(%arg0: i32) -> (i32, i32) {
    %c0_i32 = arith.constant 0 : i32
    %c0_i32_0 = arith.constant 0 : i32
    %c0_i32_1 = arith.constant 0 : i32
    return %c0_i32, %c0_i32_0 : i32, i32
  }
  func.func @transform_6(%arg0: i32) -> (i32, i32) {
    %c0_i32 = arith.constant 0 : i32
    %c0_i32_0 = arith.constant 0 : i32
    %c0_i32_1 = arith.constant 0 : i32
    return %c0_i32, %c0_i32_0 : i32, i32
  }
  func.func @transform_7(%arg0: i32) -> (i32, i32) {
    %c0_i32 = arith.constant 0 : i32
    %c0_i32_0 = arith.constant 0 : i32
    return %arg0, %c0_i32 : i32, i32
  }
}

</mosaic_0001>

<llo_original>
// kernel: tpu_custom_call.1
$region0: #{tpu_custom_call.1}
  #allocation0 [shape = 'u32[]', space=smem, size = 0x4, offset = 0x4, fixed_abs, tag = 'smem constant byte address 0x4 - core index']
  #allocation1 [shape = 'u32[144,128]{1,0:T(1,128)}', space=vmem, size = 0x12000, scoped, tag = 'internal scratch']
  #allocation2 [shape = 'f32[1,1]{1,0:T(1,128)S(6)}', space=smem, size = 0x200, scoped, tag = 'scoped memory for tpu_custom_call.1']
  %s0 = inlined_call_operand.hbm [shape: bf16[8,128], index: 0, kind: input, shape index: {}]
  %s1 = inlined_call_operand.hbm [shape: bf16[128,128], index: 1, kind: input, shape index: {}]
  %s2 = inlined_call_operand.vmem [shape: f32[1,128], index: 2, kind: input, shape index: {}]
  %s3 = inlined_call_operand.hbm [shape: bf16[128,128], index: 3, kind: input, shape index: {}]
  %s4 = inlined_call_operand.vmem [shape: f32[1,128], index: 4, kind: input, shape index: {}]
  %s5 = inlined_call_operand.vmem [shape: f32[1,128], index: 5, kind: input, shape index: {}]
  %s6 = inlined_call_operand.<no memory space> [shape: f32[1,1], index: 6, kind: input, shape index: {}]
  %s7 = inlined_call_operand.vmem [shape: f32[8,1], index: 7, kind: output, shape index: {}]
  %s8 = sld [smem:[#allocation0]]
  $region50: #{tpu_custom_call.1} parent=0
    _
  %s10 = ssub.s32 1, %s8
  %s11 = scalar_select 0, %s10, %s8
  %12 = sst [smem:[#allocation2]] %s6
  $region1: #{tpu_custom_call.1} parent=0
    #allocation3 [shape = 'u8[2048]{0}', space=vmem, size = 0x800, scoped, tag = 'input window, operand 0, single buffered']
    #allocation4 [shape = 's32[1]{0}', space=sflag, size = 0x4, scoped, tag = 'scoped memory for tpu_custom_call.1']
    #allocation5 [shape = 'u8[32768]{0}', space=vmem, size = 0x8000, scoped, tag = 'input window, operand 1, single buffered']
    #allocation6 [shape = 's32[1]{0}', space=sflag, size = 0x4, scoped, tag = 'scoped memory for tpu_custom_call.1']
    #allocation7 [shape = 'u8[32768]{0}', space=vmem, size = 0x8000, scoped, tag = 'input window, operand 3, single buffered']
    %13 = vsyncpa [#allocation4], 0
    %14 = vsyncpa [#allocation6], 0
    // Predicated region
    $region2: #{tpu_custom_call.1} parent=1 // pred_check
      _
    $region3: #{tpu_custom_call.1} parent=1 // pred_check_branch
      %16 = sbr.rel (0) target = $region5
    $region4: #{tpu_custom_call.1} parent=1 // pred_region
      %s18 = ssub.s32 64, 64
      %19 = vsyncadd [#allocation4], %s18
      %s21 = sshll.u32 [#allocation3], 4
      %s22 = int_to_ptr.vmem [resolvable:$true] %s21
      %24 = dma.hbm_to_vmem [thread:$0]  %s0, 64, %s22, [#allocation4]
    $region5: #{tpu_custom_call.1} parent=1 // pred_fallthru
      _
    // Predicated region
    $region6: #{tpu_custom_call.1} parent=1 // pred_check
      _
    $region7: #{tpu_custom_call.1} parent=1 // pred_check_branch
      %26 = sbr.rel (0) target = $region9
    $region8: #{tpu_custom_call.1} parent=1 // pred_region
      %s28 = ssub.s32 1024, 1024
      %29 = vsyncadd [#allocation6], %s28
      %s30 = sshll.u32 [#allocation5], 4
      %s31 = int_to_ptr.vmem [resolvable:$true] %s30
      %36 = dma.hbm_to_vmem [thread:$0]  %s1, 1024, %s31, [#allocation6], 64, 64, 4
    $region9: #{tpu_custom_call.1} parent=1 // pred_fallthru
      _
    // Predicated region
    $region10: #{tpu_custom_call.1} parent=1 // pred_check
      _
    $region11: #{tpu_custom_call.1} parent=1 // pred_check_branch
      %38 = sbr.rel (0) target = $region13
    $region12: #{tpu_custom_call.1} parent=1 // pred_region
      _
    $region13: #{tpu_custom_call.1} parent=1 // pred_fallthru
      _
    // Predicated region
    $region14: #{tpu_custom_call.1} parent=1 // pred_check
      _
    $region15: #{tpu_custom_call.1} parent=1 // pred_check_branch
      %40 = sbr.rel (0) target = $region17
    $region16: #{tpu_custom_call.1} parent=1 // pred_region
      %s42 = ssub.s32 1024, 1024
      %43 = vsyncadd [#allocation6], %s42
      %s44 = sshll.u32 [#allocation7], 4
      %s45 = int_to_ptr.vmem [resolvable:$true] %s44
      %50 = dma.hbm_to_vmem [thread:$0]  %s3, 1024, %s45, [#allocation6], 64, 64, 4
    $region17: #{tpu_custom_call.1} parent=1 // pred_fallthru
      _
    // Predicated region
    $region18: #{tpu_custom_call.1} parent=1 // pred_check
      _
    $region19: #{tpu_custom_call.1} parent=1 // pred_check_branch
      %52 = sbr.rel (0) target = $region21
    $region20: #{tpu_custom_call.1} parent=1 // pred_region
      _
    $region21: #{tpu_custom_call.1} parent=1 // pred_fallthru
      _
    // Predicated region
    $region22: #{tpu_custom_call.1} parent=1 // pred_check
      _
    $region23: #{tpu_custom_call.1} parent=1 // pred_check_branch
      %54 = sbr.rel (0) target = $region25
    $region24: #{tpu_custom_call.1} parent=1 // pred_region
      _
    $region25: #{tpu_custom_call.1} parent=1 // pred_fallthru
      _
    // Predicated region
    $region26: #{tpu_custom_call.1} parent=1 // pred_check
      _
    $region27: #{tpu_custom_call.1} parent=1 // pred_check_branch
      %56 = sbr.rel (0) target = $region29
    $region28: #{tpu_custom_call.1} parent=1 // pred_region
      _
    $region29: #{tpu_custom_call.1} parent=1 // pred_fallthru
      _
    // Predicated region
    $region30: #{tpu_custom_call.1} parent=1 // pred_check
      _
    $region31: #{tpu_custom_call.1} parent=1 // pred_check_branch
      %58 = sbr.rel (0) target = $region33
    $region32: #{tpu_custom_call.1} parent=1 // pred_region
      %59 = dma.done [#allocation4], 64
    $region33: #{tpu_custom_call.1} parent=1 // pred_fallthru
      _
    // Predicated region
    $region34: #{tpu_custom_call.1} parent=1 // pred_check
      _
    $region35: #{tpu_custom_call.1} parent=1 // pred_check_branch
      %61 = sbr.rel (0) target = $region37
    $region36: #{tpu_custom_call.1} parent=1 // pred_region
      %62 = dma.done [#allocation6], 1024
    $region37: #{tpu_custom_call.1} parent=1 // pred_fallthru
      _
    // Predicated region
    $region38: #{tpu_custom_call.1} parent=1 // pred_check
      _
    $region39: #{tpu_custom_call.1} parent=1 // pred_check_branch
      %64 = sbr.rel (0) target = $region41
    $region40: #{tpu_custom_call.1} parent=1 // pred_region
      %65 = dma.done [#allocation6], 1024
    $region41: #{tpu_custom_call.1} parent=1 // pred_fallthru
      _
    %v67 = vld [vmem:[#allocation3] sm:$0xf]
    %v68 = vld [vmem:[#allocation5] sm:$0xf]
    %v69 = vld [vmem:[#allocation5 + $0x4] sm:$0xf]
    %v70 = vld [vmem:[#allocation5 + $0x8] sm:$0xf]
    %v71 = vld [vmem:[#allocation5 + $0xc] sm:$0xf]
    %v72 = vld [vmem:[#allocation5 + $0x10] sm:$0xf]
    %v73 = vld [vmem:[#allocation5 + $0x14] sm:$0xf]
    %v74 = vld [vmem:[#allocation5 + $0x18] sm:$0xf]
    %v75 = vld [vmem:[#allocation5 + $0x1c] sm:$0xf]
    %v76 = vld [vmem:[#allocation5 + $0x20] sm:$0xf]
    %v77 = vld [vmem:[#allocation5 + $0x24] sm:$0xf]
    %v78 = vld [vmem:[#allocation5 + $0x28] sm:$0xf]
    %v79 = vld [vmem:[#allocation5 + $0x2c] sm:$0xf]
    %v80 = vld [vmem:[#allocation5 + $0x30] sm:$0xf]
    %v81 = vld [vmem:[#allocation5 + $0x34] sm:$0xf]
    %v82 = vld [vmem:[#allocation5 + $0x38] sm:$0xf]
    %v83 = vld [vmem:[#allocation5 + $0x3c] sm:$0xf]
    %v84 = vld [vmem:[%s2] sm:$0x1]
    %v86 = vlaneseq
    %v87 = vshrl.u32 %v86, 7
    %v88 = vsub.s32 0, %v87
    %v89 = vrot.slane %v84, %v88
    %v107 = vunpack.c.l.b16 %v68
    %v108 = vunpack.c.l.b16 %v69
    %v109 = vunpack.c.l.b16 %v70
    %v110 = vunpack.c.l.b16 %v71
    %v111 = vunpack.c.l.b16 %v72
    %v112 = vunpack.c.l.b16 %v73
    %v113 = vunpack.c.l.b16 %v74
    %v114 = vunpack.c.l.b16 %v75
    %v115 = vunpack.c.l.b16 %v76
    %v116 = vunpack.c.l.b16 %v77
    %v117 = vunpack.c.l.b16 %v78
    %v118 = vunpack.c.l.b16 %v79
    %v119 = vunpack.c.l.b16 %v80
    %v120 = vunpack.c.l.b16 %v81
    %v121 = vunpack.c.l.b16 %v82
    %v122 = vunpack.c.l.b16 %v83
    %v123 = vpack.c.b16 %v108, %v107
    %v124 = vpack.c.b16 %v110, %v109
    %v125 = vpack.c.b16 %v112, %v111
    %v126 = vpack.c.b16 %v114, %v113
    %v127 = vpack.c.b16 %v116, %v115
    %v128 = vpack.c.b16 %v118, %v117
    %v129 = vpack.c.b16 %v120, %v119
    %v130 = vpack.c.b16 %v122, %v121
    %139 = vmatprep.subr.bf16.mxu0 0
    %140 = vmatpush1.bf16.msra.mxu0 %v123
    %141 = vmatprep.subr.bf16.mxu0 0
    %142 = vmatpush1.bf16.msra.mxu0 %v124
    %143 = vmatprep.subr.bf16.mxu0 0
    %144 = vmatpush1.bf16.msra.mxu0 %v125
    %145 = vmatprep.subr.bf16.mxu0 0
    %146 = vmatpush1.bf16.msra.mxu0 %v126
    %147 = vmatprep.subr.bf16.mxu0 0
    %148 = vmatpush1.bf16.msra.mxu0 %v127
    %149 = vmatprep.subr.bf16.mxu0 0
    %150 = vmatpush1.bf16.msra.mxu0 %v128
    %151 = vmatprep.subr.bf16.mxu0 0
    %152 = vmatpush1.bf16.msra.mxu0 %v129
    %153 = vmatprep.subr.bf16.mxu0 0
    %154 = vmatpush1.bf16.msra.mxu0 %v130
    %155 = vmatprep.subr.bf16.mxu0 0
    %156 = vmatpush1.bf16.msra.mxu0 0
    %157 = vmatprep.subr.bf16.mxu0 0
    %158 = vmatpush1.bf16.msra.mxu0 0
    %159 = vmatprep.subr.bf16.mxu0 0
    %160 = vmatpush1.bf16.msra.mxu0 0
    %161 = vmatprep.subr.bf16.mxu0 0
    %162 = vmatpush1.bf16.msra.mxu0 0
    %163 = vmatprep.subr.bf16.mxu0 0
    %164 = vmatpush1.bf16.msra.mxu0 0
    %165 = vmatprep.subr.bf16.mxu0 0
    %166 = vmatpush1.bf16.msra.mxu0 0
    %167 = vmatprep.subr.bf16.mxu0 0
    %168 = vmatpush1.bf16.msra.mxu0 0
    %169 = vmatprep.subr.bf16.mxu0 0
    %170 = vmatpush1.bf16.msra.mxu0 0
    %171 = vmatprep.mubr.bf16.mxu0 0
    %172 = vmatmul.mubr.bf16.gmra.mrb[0].mxu0 %v67
    %v173 = vpop.f32.mrb[0].mxu0
    %v174 = vadd.f32 %v89, %v173
    %v175 = vpop.f32.mrb[0].mxu0
    %v176 = vpop.f32.mrb[0].mxu0
    %v177 = vpop.f32.mrb[0].mxu0
    %178 = vdwg.mxu0
    %v179 = vmax.f32 %v174, 0.0
    %v180 = vpack.c.bf16 %v179, %v179
    %v181 = vld [vmem:[#allocation7] sm:$0xf]
    %v182 = vld [vmem:[#allocation7 + $0x4] sm:$0xf]
    %v183 = vld [vmem:[#allocation7 + $0x8] sm:$0xf]
    %v184 = vld [vmem:[#allocation7 + $0xc] sm:$0xf]
    %v185 = vld [vmem:[#allocation7 + $0x10] sm:$0xf]
    %v186 = vld [vmem:[#allocation7 + $0x14] sm:$0xf]
    %v187 = vld [vmem:[#allocation7 + $0x18] sm:$0xf]
    %v188 = vld [vmem:[#allocation7 + $0x1c] sm:$0xf]
    %v189 = vld [vmem:[#allocation7 + $0x20] sm:$0xf]
    %v190 = vld [vmem:[#allocation7 + $0x24] sm:$0xf]
    %v191 = vld [vmem:[#allocation7 + $0x28] sm:$0xf]
    %v192 = vld [vmem:[#allocation7 + $0x2c] sm:$0xf]
    %v193 = vld [vmem:[#allocation7 + $0x30] sm:$0xf]
    %v194 = vld [vmem:[#allocation7 + $0x34] sm:$0xf]
    %v195 = vld [vmem:[#allocation7 + $0x38] sm:$0xf]
    %v196 = vld [vmem:[#allocation7 + $0x3c] sm:$0xf]
    %v197 = vld [vmem:[%s4] sm:$0x1]
    %v199 = vlaneseq
    %v200 = vshrl.u32 %v199, 7
    %v201 = vsub.s32 0, %v200
    %v202 = vrot.slane %v197, %v201
    %v220 = vunpack.c.l.b16 %v181
    %v221 = vunpack.c.l.b16 %v182
    %v222 = vunpack.c.l.b16 %v183
    %v223 = vunpack.c.l.b16 %v184
    %v224 = vunpack.c.l.b16 %v185
    %v225 = vunpack.c.l.b16 %v186
    %v226 = vunpack.c.l.b16 %v187
    %v227 = vunpack.c.l.b16 %v188
    %v228 = vunpack.c.l.b16 %v189
    %v229 = vunpack.c.l.b16 %v190
    %v230 = vunpack.c.l.b16 %v191
    %v231 = vunpack.c.l.b16 %v192
    %v232 = vunpack.c.l.b16 %v193
    %v233 = vunpack.c.l.b16 %v194
    %v234 = vunpack.c.l.b16 %v195
    %v235 = vunpack.c.l.b16 %v196
    %v236 = vpack.c.b16 %v221, %v220
    %v237 = vpack.c.b16 %v223, %v222
    %v238 = vpack.c.b16 %v225, %v224
    %v239 = vpack.c.b16 %v227, %v226
    %v240 = vpack.c.b16 %v229, %v228
    %v241 = vpack.c.b16 %v231, %v230
    %v242 = vpack.c.b16 %v233, %v232
    %v243 = vpack.c.b16 %v235, %v234
    %252 = vmatprep.subr.bf16.mxu0 0
    %253 = vmatpush1.bf16.msra.mxu0 %v236
    %254 = vmatprep.subr.bf16.mxu0 0
    %255 = vmatpush1.bf16.msra.mxu0 %v237
    %256 = vmatprep.subr.bf16.mxu0 0
    %257 = vmatpush1.bf16.msra.mxu0 %v238
    %258 = vmatprep.subr.bf16.mxu0 0
    %259 = vmatpush1.bf16.msra.mxu0 %v239
    %260 = vmatprep.subr.bf16.mxu0 0
    %261 = vmatpush1.bf16.msra.mxu0 %v240
    %262 = vmatprep.subr.bf16.mxu0 0
    %263 = vmatpush1.bf16.msra.mxu0 %v241
    %264 = vmatprep.subr.bf16.mxu0 0
    %265 = vmatpush1.bf16.msra.mxu0 %v242
    %266 = vmatprep.subr.bf16.mxu0 0
    %267 = vmatpush1.bf16.msra.mxu0 %v243
    %268 = vmatprep.subr.bf16.mxu0 0
    %269 = vmatpush1.bf16.msra.mxu0 0
    %270 = vmatprep.subr.bf16.mxu0 0
    %271 = vmatpush1.bf16.msra.mxu0 0
    %272 = vmatprep.subr.bf16.mxu0 0
    %273 = vmatpush1.bf16.msra.mxu0 0
    %274 = vmatprep.subr.bf16.mxu0 0
    %275 = vmatpush1.bf16.msra.mxu0 0
    %276 = vmatprep.subr.bf16.mxu0 0
    %277 = vmatpush1.bf16.msra.mxu0 0
    %278 = vmatprep.subr.bf16.mxu0 0
    %279 = vmatpush1.bf16.msra.mxu0 0
    %280 = vmatprep.subr.bf16.mxu0 0
    %281 = vmatpush1.bf16.msra.mxu0 0
    %282 = vmatprep.subr.bf16.mxu0 0
    %283 = vmatpush1.bf16.msra.mxu0 0
    %284 = vmatprep.mubr.bf16.mxu0 0
    %285 = vmatmul.mubr.bf16.gmra.mrb[0].mxu0 %v180
    %v286 = vpop.f32.mrb[0].mxu0
    %v287 = vadd.f32 %v202, %v286
    %v288 = vpop.f32.mrb[0].mxu0
    %v289 = vpop.f32.mrb[0].mxu0
    %v290 = vpop.f32.mrb[0].mxu0
    %291 = vdwg.mxu0
    %v292 = vmax.f32 %v287, 0.0
    %v293 = vld [vmem:[%s5] sm:$0x1]
    %v295 = vlaneseq
    %v296 = vshrl.u32 %v295, 7
    %v297 = vsub.s32 0, %v296
    %v298 = vrot.slane %v293, %v297
    %v300 = vmul.f32 %v292, %v298
    %301 = vadd.xlane.f32.xlu0 %v300
    %v302 = vpop.xlane.xlu0 %301
    %s303 = sld [smem:[#allocation2]]
    %v304 = vstv %s303
    %v305 = vadd.f32 %v302, %v304
    %vm306 = vcmask 7168
    %307 = vst.msk [vmem:[%s7] sm:$0xff] %vm306, %v305
    // Predicated region
    $region42: #{tpu_custom_call.1} parent=1 // pred_check
      _
    $region43: #{tpu_custom_call.1} parent=1 // pred_check_branch
      %309 = sbr.rel (0) target = $region45
    $region44: #{tpu_custom_call.1} parent=1 // pred_region
      _
    $region45: #{tpu_custom_call.1} parent=1 // pred_fallthru
      _
    // Predicated region
    $region46: #{tpu_custom_call.1} parent=1 // pred_check
      _
    $region47: #{tpu_custom_call.1} parent=1 // pred_check_branch
      %311 = sbr.rel (0) target = $region49
    $region48: #{tpu_custom_call.1} parent=1 // pred_region
      _
    $region49: #{tpu_custom_call.1} parent=1 // pred_fallthru
      _
    %312 = vsyncpa [#allocation4], 1
    %313 = vsyncpa [#allocation6], 1

</llo_original>
